<compile_context>
chip_gen: v5e
topology: v5e:2x2
jax: 0.10.0
libtpu: 0.0.40
codegen_flags: <defaults>
</compile_context>

<pallas_src>
import functools

import jax
import jax.numpy as jnp
from jax.experimental import pallas as pl
from jax.experimental.pallas import tpu as pltpu


# ----------------------------------------------------------------------------- helpers
def _round_up(n, m):
    return ((n + m - 1) // m) * m


def _pick_tile_rows(n_rows, target_steps, cap):
    """Row tile: multiple of 8, >= target_steps grid steps when possible, <= cap."""
    if n_rows <= 8:
        return n_rows
    t = min(cap, _round_up(pl.cdiv(n_rows, target_steps), 8))
    return n_rows if t >= n_rows else t


def _vmem_capacity():
    try:
        return int(pltpu.get_tpu_info().vmem_capacity_bytes)
    except Exception:
        return 64 << 20  # conservative default (v7x per-TensorCore)


def _sigmoid(z):
    # Exact identity for sigmoid; a single EUP transcendental (tanh) per element
    # instead of exp + reciprocal.
    return 0.5 * (1.0 + jnp.tanh(0.5 * z))


# ----------------------------------------------------------------------------- kernels
def _fnn3_kernel(x_ref, w1_ref, b1_ref, w2_ref, b2_ref, w3_ref, b3_ref, o_ref):
    # x arrives in its native dtype; cast on the VPU right before the MXU.
    x = x_ref[...].astype(w1_ref.dtype)
    # fc1 -> sigmoid (f32 accumulation, f32 nonlinearity)
    h1 = jnp.dot(x, w1_ref[...], preferred_element_type=jnp.float32)
    h1 = _sigmoid(h1 + b1_ref[...])
    # fc2 -> sigmoid
    h2 = jnp.dot(h1.astype(w2_ref.dtype), w2_ref[...],
                 preferred_element_type=jnp.float32)
    h2 = _sigmoid(h2 + b2_ref[...])
    # fc3 (no activation)
    out = jnp.dot(h2.astype(w3_ref.dtype), w3_ref[...],
                  preferred_element_type=jnp.float32)
    o_ref[...] = (out + b3_ref[...]).astype(o_ref.dtype)


def _linear_kernel(x_ref, w_ref, b_ref, o_ref, *, apply_sigmoid):
    z = jnp.dot(x_ref[...].astype(w_ref.dtype), w_ref[...],
                preferred_element_type=jnp.float32)
    z = z + b_ref[...]
    if apply_sigmoid:
        z = _sigmoid(z)
    o_ref[...] = z.astype(o_ref.dtype)


def _tiled_linear(x, w, b2d, *, apply_sigmoid, out_dtype, budget):
    """One Linear(+sigmoid), tiled over rows and output columns (full K per block)."""
    M, K = x.shape
    N = w.shape[1]  # already a multiple of 128
    x_item = jnp.dtype(x.dtype).itemsize
    w_item = jnp.dtype(w.dtype).itemsize
    o_item = jnp.dtype(out_dtype).itemsize

    tile_m = _pick_tile_rows(M, target_steps=2, cap=256)
    tile_n = min(512, N)

    def need(tm, tn):
        return (2 * tm * K * x_item          # x strip (double-buffered, native dtype)
                + 2 * K * tn * w_item        # W strip (double-buffered)
                + 2 * tn * 4                 # bias
                + 2 * tm * tn * o_item       # out tile (double-buffered)
                + tm * K * w_item            # in-kernel cast of x
                + tm * tn * 4)               # f32 result before cast

    while need(tile_m, tile_n) > budget and (tile_n > 128 or tile_m > 8):
        if tile_n > 128:
            tile_n = max(128, (tile_n // 2) // 128 * 128)
        else:
            tile_m = max(8, (tile_m // 2) // 8 * 8)

    vmem_limit = int(max(min(need(tile_m, tile_n) + (8 << 20), budget),
                         need(tile_m, tile_n)))
    grid = (pl.cdiv(M, tile_m), pl.cdiv(N, tile_n))
    kernel = functools.partial(_linear_kernel, apply_sigmoid=apply_sigmoid)
    return pl.pallas_call(
        kernel,
        out_shape=jax.ShapeDtypeStruct((M, N), out_dtype),
        grid_spec=pltpu.PrefetchScalarGridSpec(
            num_scalar_prefetch=0,
            grid=grid,
            in_specs=[
                pl.BlockSpec((tile_m, K), lambda i, j: (i, 0)),
                pl.BlockSpec((K, tile_n), lambda i, j: (0, j)),
                pl.BlockSpec((1, tile_n), lambda i, j: (0, j)),
            ],
            out_specs=pl.BlockSpec((tile_m, tile_n), lambda i, j: (i, j)),
        ),
        compiler_params=pltpu.CompilerParams(
            dimension_semantics=("parallel", "parallel"),
            vmem_limit_bytes=vmem_limit,
        ),
    )(x, w, b2d)


# ----------------------------------------------------------------------------- wrapper
def fnn_wo_hpo_3layer(x, w1, b1, w2, b2, w3, b3, *, tile_b=None,
                      compute_dtype=jnp.bfloat16, out_dtype=None,
                      force_layered=False):
    """sigmoid(sigmoid(x@W1+b1)@W2+b2)@W3+b3 via Pallas TPU kernels.

    Weights are stored pre-transposed as (in, out) == W.T of PyTorch's (out, in).
    compute_dtype=jnp.float32 is the exact-numerics escape hatch.
    """
    B, in_dim = x.shape
    hidden = w1.shape[1]
    out_dim = w3.shape[1]
    out_dtype = x.dtype if out_dtype is None else out_dtype

    hid_pad = _round_up(hidden, 128)
    out_pad = _round_up(out_dim, 128)

    # ---- weight/bias prep: lane-dense feature dims.  Padded contraction rows of
    # W2/W3 are exact zeros so the padded h1/h2 columns (sigmoid(0)=0.5) never
    # contribute.  x is deliberately left untouched (no HBM pass over it).
    w1_c, b1_c, w2_c, b2_c, w3_c, b3_c = w1, b1, w2, b2, w3, b3
    if hid_pad != hidden:
        hp = hid_pad - hidden
        w1_c = jnp.pad(w1_c, ((0, 0), (0, hp)))
        b1_c = jnp.pad(b1_c, (0, hp))
        w2_c = jnp.pad(w2_c, ((0, hp), (0, hp)))
        b2_c = jnp.pad(b2_c, (0, hp))
        w3_c = jnp.pad(w3_c, ((0, hp), (0, 0)))
    if out_pad != out_dim:
        op = out_pad - out_dim
        w3_c = jnp.pad(w3_c, ((0, 0), (0, op)))
        b3_c = jnp.pad(b3_c, (0, op))

    w1_c = w1_c.astype(compute_dtype)
    w2_c = w2_c.astype(compute_dtype)
    w3_c = w3_c.astype(compute_dtype)
    b1_2d = b1_c.reshape(1, hid_pad).astype(jnp.float32)
    b2_2d = b2_c.reshape(1, hid_pad).astype(jnp.float32)
    b3_2d = b3_c.reshape(1, out_pad).astype(jnp.float32)

    x_item = jnp.dtype(x.dtype).itemsize
    c_item = jnp.dtype(compute_dtype).itemsize
    o_item = jnp.dtype(out_dtype).itemsize

    weight_bytes = (in_dim * hid_pad + hid_pad * hid_pad + hid_pad * out_pad) * c_item
    bias_bytes = (2 * hid_pad + out_pad) * 4

    vmem_cap = _vmem_capacity()
    budget = max(vmem_cap - (12 << 20), 16 << 20)  # headroom for compiler scratch

    single_buf = hasattr(pl, "Buffered")  # constant-index weights -> 1 VMEM buffer
    wbuf = 1 if single_buf else 2

    def _vmem_need(tb):
        return (2 * tb * in_dim * x_item       # x (double-buffered, native dtype)
                + 2 * tb * out_pad * o_item    # out (double-buffered)
                + wbuf * (weight_bytes + bias_bytes)
                + tb * in_dim * c_item         # in-kernel cast of x
                + 2 * tb * hid_pad * 4         # h1, h2 (f32)
                + tb * out_pad * 4)            # f32 result before cast

    # ---- row tile: target >= 2 grid steps (v7x megacore), up to 512 rows,
    # shrunk until it fits the VMEM budget.
    if tile_b is None:
        tile_b = _pick_tile_rows(B, target_steps=2, cap=512)
    else:
        tile_b = int(tile_b)
        tile_b = B if tile_b >= B else max(8, (tile_b // 8) * 8)
    while _vmem_need(tile_b) > budget and tile_b > 8:
        tile_b = max(8, (tile_b // 2) // 8 * 8)

    if force_layered or _vmem_need(tile_b) > budget:
        # Weights too large to keep resident in VMEM for the fused kernel:
        # layer-by-layer Pallas kernels tiled over rows and output columns.
        # TODO(synk): add contraction (K) tiling for extremely large in_dim/hidden.
        h = _tiled_linear(x, w1_c, b1_2d, apply_sigmoid=True,
                          out_dtype=compute_dtype, budget=budget)
        h = _tiled_linear(h, w2_c, b2_2d, apply_sigmoid=True,
                          out_dtype=compute_dtype, budget=budget)
        out_padded = _tiled_linear(h, w3_c, b3_2d, apply_sigmoid=False,
                                   out_dtype=out_dtype, budget=budget)
    else:
        const_kwargs = (dict(pipeline_mode=pl.Buffered(buffer_count=1))
                        if single_buf else {})
        in_specs = [
            pl.BlockSpec((tile_b, in_dim), lambda i: (i, 0)),                    # x
            pl.BlockSpec((in_dim, hid_pad), lambda i: (0, 0), **const_kwargs),   # W1
            pl.BlockSpec((1, hid_pad), lambda i: (0, 0), **const_kwargs),        # b1
            pl.BlockSpec((hid_pad, hid_pad), lambda i: (0, 0), **const_kwargs),  # W2
            pl.BlockSpec((1, hid_pad), lambda i: (0, 0), **const_kwargs),        # b2
            pl.BlockSpec((hid_pad, out_pad), lambda i: (0, 0), **const_kwargs),  # W3
            pl.BlockSpec((1, out_pad), lambda i: (0, 0), **const_kwargs),        # b3
        ]
        out_specs = pl.BlockSpec((tile_b, out_pad), lambda i: (i, 0))

        flops = 2 * B * (in_dim * hid_pad + hid_pad * hid_pad + hid_pad * out_pad)
        bytes_accessed = (B * in_dim * x_item + weight_bytes + bias_bytes
                          + B * out_pad * o_item)
        cost = pl.CostEstimate(flops=flops, transcendentals=2 * B * hid_pad,
                               bytes_accessed=bytes_accessed)
        need = _vmem_need(tile_b)
        vmem_limit = int(max(min(need + (8 << 20), budget), need))

        out_padded = pl.pallas_call(
            _fnn3_kernel,
            out_shape=jax.ShapeDtypeStruct((B, out_pad), out_dtype),
            grid_spec=pltpu.PrefetchScalarGridSpec(
                num_scalar_prefetch=0,
                grid=(pl.cdiv(B, tile_b),),     # ragged batch: no padding pass on x
                in_specs=in_specs,
                out_specs=out_specs,
            ),
            compiler_params=pltpu.CompilerParams(
                dimension_semantics=("parallel",),
                vmem_limit_bytes=vmem_limit,
            ),
            cost_estimate=cost,
        )(x, w1_c, b1_2d, w2_c, b2_2d, w3_c, b3_2d)

    if out_pad != out_dim:
        out_padded = out_padded[:, :out_dim]
    return out_padded


# ----------------------------------------------------------------------------- test
def _init_linear(key, in_dim, out_dim):
    """Deterministic init mimicking nn.Linear default (uniform +-1/sqrt(in))."""
    kw, kb = jax.random.split(key)
    bound = 1.0 / jnp.sqrt(jnp.float32(in_dim))
    # stored as (in, out) == W.T relative to PyTorch's (out, in)
    w = jax.random.uniform(kw, (in_dim, out_dim), jnp.float32, -bound, bound)
    b = jax.random.uniform(kb, (out_dim,), jnp.float32, -bound, bound)
    return w, b


if __name__ == "__main__":
    key = jax.random.PRNGKey(0)
    k_x, k1, k2, k3 = jax.random.split(key, 4)

    batch = 50            # ragged: exercises the partial last grid block
    input_size = 32
    hidden_size = 32
    output_size = 16

    x = jax.random.normal(k_x, (batch, input_size), jnp.float32)
    w1, b1 = _init_linear(k1, input_size, hidden_size)
    w2, b2 = _init_linear(k2, hidden_size, hidden_size)
    w3, b3 = _init_linear(k3, hidden_size, output_size)

    # Pure-JAX reference matching the PyTorch module
    hf = jax.nn.sigmoid(x @ w1 + b1)
    hf = jax.nn.sigmoid(hf @ w2 + b2)
    ref_f32 = hf @ w3 + b3

    # default fused path (bf16 operands, f32 accumulation), grid >= 2, ragged batch
    out_bf16 = jax.block_until_ready(fnn_wo_hpo_3layer(x, w1, b1, w2, b2, w3, b3))
    # explicit small tile (many grid steps, ragged last block)
    out_tiled = jax.block_until_ready(
        fnn_wo_hpo_3layer(x, w1, b1, w2, b2, w3, b3, tile_b=8))
    # f32 escape hatch
    out_f32 = jax.block_until_ready(
        fnn_wo_hpo_3layer(x, w1, b1, w2, b2, w3, b3, compute_dtype=jnp.float32))
    # layer-by-layer large-hidden code path (forced, f32)
    out_layered = jax.block_until_ready(
        fnn_wo_hpo_3layer(x, w1, b1, w2, b2, w3, b3, compute_dtype=jnp.float32,
                          force_layered=True))

    assert out_bf16.shape == (batch, output_size)
    assert out_tiled.shape == (batch, output_size)
    assert out_f32.shape == (batch, output_size)
    assert out_layered.shape == (batch, output_size)

    assert jnp.allclose(out_f32, ref_f32, atol=2e-2, rtol=2e-2)
    assert jnp.allclose(out_layered, ref_f32, atol=2e-2, rtol=2e-2)
    assert jnp.allclose(out_layered, out_f32, atol=1e-2, rtol=1e-2)
    assert jnp.allclose(out_bf16, ref_f32, atol=5e-2, rtol=5e-2)
    assert jnp.allclose(out_tiled, ref_f32, atol=5e-2, rtol=5e-2)
    assert jnp.allclose(out_bf16, out_tiled, atol=1e-3, rtol=1e-3)

    print("KERNEL_OK")
</pallas_src>

<mosaic_0001>
module attributes {stable_mosaic.version = 11 : i64} {
  func.func @_fnn3_kernel(%arg0: i32, %arg1: memref<32x32xf32, #tpu.memory_space<vmem>>, %arg2: memref<32x128xbf16, #tpu.memory_space<vmem>>, %arg3: memref<1x128xf32, #tpu.memory_space<vmem>>, %arg4: memref<128x128xbf16, #tpu.memory_space<vmem>>, %arg5: memref<1x128xf32, #tpu.memory_space<vmem>>, %arg6: memref<128x128xbf16, #tpu.memory_space<vmem>>, %arg7: memref<1x128xf32, #tpu.memory_space<vmem>>, %arg8: memref<32x128xf32, #tpu.memory_space<vmem>>) attributes {dimension_semantics = [#tpu.dimension_semantics<parallel>], iteration_bounds = array<i64: 2>, scalar_prefetch = 0 : i64, scratch_operands = 0 : i64, tpu.core_type = #tpu.core_type<tc>, window_params = [{transform_indices = @transform_0, window_bounds = array<i64: 32, 32>}, {pipeline_mode = #tpu.pipeline_mode<synchronous>, transform_indices = @transform_1, window_bounds = array<i64: 32, 128>}, {pipeline_mode = #tpu.pipeline_mode<synchronous>, transform_indices = @transform_2, window_bounds = array<i64: 1, 128>}, {pipeline_mode = #tpu.pipeline_mode<synchronous>, transform_indices = @transform_3, window_bounds = array<i64: 128, 128>}, {pipeline_mode = #tpu.pipeline_mode<synchronous>, transform_indices = @transform_4, window_bounds = array<i64: 1, 128>}, {pipeline_mode = #tpu.pipeline_mode<synchronous>, transform_indices = @transform_5, window_bounds = array<i64: 128, 128>}, {pipeline_mode = #tpu.pipeline_mode<synchronous>, transform_indices = @transform_6, window_bounds = array<i64: 1, 128>}, {transform_indices = @transform_7, window_bounds = array<i64: 32, 128>}]} {
    %c0 = arith.constant 0 : index
    %c0_0 = arith.constant 0 : index
    %0 = vector.load %arg1[%c0, %c0_0] : memref<32x32xf32, #tpu.memory_space<vmem>>, vector<32x32xf32>
    %1 = arith.truncf %0 : vector<32x32xf32> to vector<32x32xbf16>
    %c0_1 = arith.constant 0 : index
    %c0_2 = arith.constant 0 : index
    %2 = vector.load %arg2[%c0_1, %c0_2] : memref<32x128xbf16, #tpu.memory_space<vmem>>, vector<32x128xbf16>
    %cst = arith.constant dense<0.000000e+00> : vector<32x128xf32>
    %3 = tpu.matmul %1, %2, %cst {dimension_numbers = #tpu.dot_dimension_numbers<[1], [0], [0], [1], [0, 0, 1, 1], [], []>} : vector<32x32xbf16>, vector<32x128xbf16>, vector<32x128xf32> -> vector<32x128xf32>
    %c0_3 = arith.constant 0 : index
    %c0_4 = arith.constant 0 : index
    %4 = vector.load %arg3[%c0_3, %c0_4] : memref<1x128xf32, #tpu.memory_space<vmem>>, vector<1x128xf32>
    %5 = vector.broadcast %4 : vector<1x128xf32> to vector<32x128xf32>
    %6 = arith.addf %3, %5 : vector<32x128xf32>
    %cst_5 = arith.constant 5.000000e-01 : f32
    %7 = vector.broadcast %cst_5 : f32 to vector<32x128xf32>
    %8 = arith.mulf %7, %6 : vector<32x128xf32>
    %9 = math.tanh %8 : vector<32x128xf32>
    %cst_6 = arith.constant 1.000000e+00 : f32
    %10 = vector.broadcast %cst_6 : f32 to vector<32x128xf32>
    %11 = arith.addf %10, %9 : vector<32x128xf32>
    %cst_7 = arith.constant 5.000000e-01 : f32
    %12 = vector.broadcast %cst_7 : f32 to vector<32x128xf32>
    %13 = arith.mulf %12, %11 : vector<32x128xf32>
    %14 = arith.truncf %13 : vector<32x128xf32> to vector<32x128xbf16>
    %c0_8 = arith.constant 0 : index
    %c0_9 = arith.constant 0 : index
    %15 = vector.load %arg4[%c0_8, %c0_9] : memref<128x128xbf16, #tpu.memory_space<vmem>>, vector<128x128xbf16>
    %cst_10 = arith.constant dense<0.000000e+00> : vector<32x128xf32>
    %16 = tpu.matmul %14, %15, %cst_10 {dimension_numbers = #tpu.dot_dimension_numbers<[1], [0], [0], [1], [0, 0, 1, 1], [], []>} : vector<32x128xbf16>, vector<128x128xbf16>, vector<32x128xf32> -> vector<32x128xf32>
    %c0_11 = arith.constant 0 : index
    %c0_12 = arith.constant 0 : index
    %17 = vector.load %arg5[%c0_11, %c0_12] : memref<1x128xf32, #tpu.memory_space<vmem>>, vector<1x128xf32>
    %18 = vector.broadcast %17 : vector<1x128xf32> to vector<32x128xf32>
    %19 = arith.addf %16, %18 : vector<32x128xf32>
    %cst_13 = arith.constant 5.000000e-01 : f32
    %20 = vector.broadcast %cst_13 : f32 to vector<32x128xf32>
    %21 = arith.mulf %20, %19 : vector<32x128xf32>
    %22 = math.tanh %21 : vector<32x128xf32>
    %cst_14 = arith.constant 1.000000e+00 : f32
    %23 = vector.broadcast %cst_14 : f32 to vector<32x128xf32>
    %24 = arith.addf %23, %22 : vector<32x128xf32>
    %cst_15 = arith.constant 5.000000e-01 : f32
    %25 = vector.broadcast %cst_15 : f32 to vector<32x128xf32>
    %26 = arith.mulf %25, %24 : vector<32x128xf32>
    %27 = arith.truncf %26 : vector<32x128xf32> to vector<32x128xbf16>
    %c0_16 = arith.constant 0 : index
    %c0_17 = arith.constant 0 : index
    %28 = vector.load %arg6[%c0_16, %c0_17] : memref<128x128xbf16, #tpu.memory_space<vmem>>, vector<128x128xbf16>
    %cst_18 = arith.constant dense<0.000000e+00> : vector<32x128xf32>
    %29 = tpu.matmul %27, %28, %cst_18 {dimension_numbers = #tpu.dot_dimension_numbers<[1], [0], [0], [1], [0, 0, 1, 1], [], []>} : vector<32x128xbf16>, vector<128x128xbf16>, vector<32x128xf32> -> vector<32x128xf32>
    %c0_19 = arith.constant 0 : index
    %c0_20 = arith.constant 0 : index
    %30 = vector.load %arg7[%c0_19, %c0_20] : memref<1x128xf32, #tpu.memory_space<vmem>>, vector<1x128xf32>
    %31 = vector.broadcast %30 : vector<1x128xf32> to vector<32x128xf32>
    %32 = arith.addf %29, %31 : vector<32x128xf32>
    %c0_21 = arith.constant 0 : index
    %c0_22 = arith.constant 0 : index
    %33 = vector.load %arg8[%c0_21, %c0_22] : memref<32x128xf32, #tpu.memory_space<vmem>>, vector<32x128xf32>
    tpu.vector_store %arg8[%c0_21, %c0_22], %32 {strides = array<i32>} : memref<32x128xf32, #tpu.memory_space<vmem>>, vector<32x128xf32>,
    return
  }
  func.func @transform_0(%arg0: i32) -> (i32, i32) {
    %c0_i32 = arith.constant 0 : i32
    %c0_i32_0 = arith.constant 0 : i32
    return %arg0, %c0_i32 : i32, i32
  }
  func.func @transform_1(%arg0: i32) -> (i32, i32) {
    %c0_i32 = arith.constant 0 : i32
    %c0_i32_0 = arith.constant 0 : i32
    %c0_i32_1 = arith.constant 0 : i32
    return %c0_i32, %c0_i32_0 : i32, i32
  }
  func.func @transform_2(%arg0: i32) -> (i32, i32) {
    %c0_i32 = arith.constant 0 : i32
    %c0_i32_0 = arith.constant 0 : i32
    %c0_i32_1 = arith.constant 0 : i32
    return %c0_i32, %c0_i32_0 : i32, i32
  }
  func.func @transform_3(%arg0: i32) -> (i32, i32) {
    %c0_i32 = arith.constant 0 : i32
    %c0_i32_0 = arith.constant 0 : i32
    %c0_i32_1 = arith.constant 0 : i32
    return %c0_i32, %c0_i32_0 : i32, i32
  }
  func.func @transform_4(%arg0: i32) -> (i32, i32) {
    %c0_i32 = arith.constant 0 : i32
    %c0_i32_0 = arith.constant 0 : i32
    %c0_i32_1 = arith.constant 0 : i32
    return %c0_i32, %c0_i32_0 : i32, i32
  }
  func.func @transform_5(%arg0: i32) -> (i32, i32) {
    %c0_i32 = arith.constant 0 : i32
    %c0_i32_0 = arith.constant 0 : i32
    %c0_i32_1 = arith.constant 0 : i32
    return %c0_i32, %c0_i32_0 : i32, i32
  }
  func.func @transform_6(%arg0: i32) -> (i32, i32) {
    %c0_i32 = arith.constant 0 : i32
    %c0_i32_0 = arith.constant 0 : i32
    %c0_i32_1 = arith.constant 0 : i32
    return %c0_i32, %c0_i32_0 : i32, i32
  }
  func.func @transform_7(%arg0: i32) -> (i32, i32) {
    %c0_i32 = arith.constant 0 : i32
    %c0_i32_0 = arith.constant 0 : i32
    return %arg0, %c0_i32 : i32, i32
  }
}

</mosaic_0001>

<llo_original>
// kernel: tpu_custom_call.1
$region0: #{tpu_custom_call.1}
  #allocation0 [shape = 'u32[]', space=smem, size = 0x4, offset = 0x4, fixed_abs, tag = 'smem constant byte address 0x4 - core index']
  #allocation1 [shape = 'u32[72,128]{1,0:T(1,128)}', space=vmem, size = 0x9000, scoped, tag = 'internal scratch']
  %s0 = inlined_call_operand.vmem [shape: f32[50,32], index: 0, kind: input, shape index: {}]
  %s1 = inlined_call_operand.vmem [shape: bf16[32,128], index: 1, kind: input, shape index: {}]
  %s2 = inlined_call_operand.vmem [shape: f32[1,128], index: 2, kind: input, shape index: {}]
  %s3 = inlined_call_operand.vmem [shape: bf16[128,128], index: 3, kind: input, shape index: {}]
  %s4 = inlined_call_operand.vmem [shape: f32[1,128], index: 4, kind: input, shape index: {}]
  %s5 = inlined_call_operand.hbm [shape: bf16[128,128], index: 5, kind: input, shape index: {}]
  %s6 = inlined_call_operand.vmem [shape: f32[1,128], index: 6, kind: input, shape index: {}]
  %s7 = inlined_call_operand.hbm [shape: f32[50,128], index: 7, kind: output, shape index: {}]
  %s8 = sld [smem:[#allocation0]]
  $region65: #{tpu_custom_call.1} parent=0
    _
  %s10 = ssub.s32 1, %s8
  %s11 = scalar_select 0, %s10, %s8
  $region1: #{tpu_custom_call.1} parent=0
    #allocation2 [shape = 'u8[32768]{0}', space=vmem, size = 0x8000, scoped, tag = 'input window, operand 5, single buffered']
    #allocation3 [shape = 's32[2]{0}', space=sflag, size = 0x8, scoped, tag = 'scoped memory for tpu_custom_call.1']
    #allocation4 [shape = 's32[2]{0}', space=sflag, size = 0x8, scoped, tag = 'scoped memory for tpu_custom_call.1']
    #allocation5 [shape = 'u8[32768]{0}', space=vmem, size = 0x8000, scoped, tag = 'output window, operand 0']
    %12 = vsyncpa [#allocation3], 0
    %13 = vsyncpa [#allocation4], 0
    %s14 = scalar_lea.sflag [#allocation4], 1
    %15 = vsyncpa %s14, 0
    loop: start=0, step=1, limit=4
    $region2: #{tpu_custom_call.1} parent=1 // loop_pre_header
      _
    $region3: #{tpu_custom_call.1} parent=1 // loop_header
      %s17 = sphi 0, %s21
      %p18 = scmp.ge.s32.totalorder %s17, 4
      %s27 = sphi 0, %s29
      %s30 = sphi 0, %s27
      %s31 = sphi 0, %s30
      %s47 = sphi 0, %s31
      %s51 = sphi 0, %s51
      %s53 = sphi 0, %s51
      %s54 = sphi 0, %s53
      %s68 = sphi 0, %s54
      %s72 = sphi 0, %s72
      %s74 = sphi 0, %s72
      %s75 = sphi 0, %s74
      %s89 = sphi 0, %s75
      %s93 = sphi 0, %s93
      %s95 = sphi 0, %s93
      %s96 = sphi 0, %s95
      %s110 = sphi 0, %s96
      %s114 = sphi 0, %s114
      %s116 = sphi 0, %s114
      %s117 = sphi 0, %s116
      %s131 = sphi 0, %s117
      %s135 = sphi 0, %s135
      %s137 = sphi 0, %s135
      %s138 = sphi 0, %s137
      %s152 = sphi 0, %s138
      %s156 = sphi 0, %s156
      %s158 = sphi 0, %s156
      %s159 = sphi 0, %s158
      %s173 = sphi 0, %s159
      %s179 = sphi 0, %s181
      %s182 = sphi 0, %s179
      %s183 = sphi 0, %s182
      %s199 = sphi 0, %s183
    $region4: #{tpu_custom_call.1} parent=1 // loop_header_branch
      %20 = sbr.rel (%p18) target = $region8
    $region5: #{tpu_custom_call.1} parent=1 // loop_body
      %s22 = ssub.s32 %s17, 1
      %s23 = ssub.s32 %s17, 2
      %s24 = sadd.s32 %s17, 1
      %s25 = ssub.s32 %s17, %s24
      %p26 = scmp.eq.s32.totalorder %s25, 0
      %s28 = sadd.s32 %s27, 1
      %s29 = scalar_select %p26, %s27, %s28
      %p32 = pneg %p26
      %p33 = scmp.eq.s32.totalorder %s17, 1
      %p34 = por %p32, %p33
      %p35 = scmp.ne.s32.totalorder %s27, %s30
      %p36 = scmp.eq.s32.totalorder %s17, 0
      %p37 = por %p35, %p36
      %p38 = scmp.ne.s32.totalorder %s27, %s30
      %p39 = scmp.eq.s32.totalorder %s22, 1
      %p40 = por %p38, %p39
      %p41 = scmp.ne.s32.totalorder %s30, %s31
      %p42 = scmp.eq.s32.totalorder %s22, 0
      %p43 = por %p41, %p42
      %p44 = scmp.ne.s32.totalorder %s30, %s31
      %p45 = scmp.eq.s32.totalorder %s23, 1
      %p46 = por %p44, %p45
      %p48 = scmp.ne.s32.totalorder %s31, %s47
      %p49 = scmp.eq.s32.totalorder %s23, 0
      %p50 = por %p48, %p49
      %s52 = sadd.s32 %s51, 1
      %p55 = scmp.eq.s32.totalorder %s17, 1
      %p56 = scmp.ne.s32.totalorder %s51, %s53
      %p57 = scmp.eq.s32.totalorder %s17, 0
      %p58 = por %p56, %p57
      %p59 = scmp.ne.s32.totalorder %s51, %s53
      %p60 = scmp.eq.s32.totalorder %s22, 1
      %p61 = por %p59, %p60
      %p62 = scmp.ne.s32.totalorder %s53, %s54
      %p63 = scmp.eq.s32.totalorder %s22, 0
      %p64 = por %p62, %p63
      %p65 = scmp.ne.s32.totalorder %s53, %s54
      %p66 = scmp.eq.s32.totalorder %s23, 1
      %p67 = por %p65, %p66
      %p69 = scmp.ne.s32.totalorder %s54, %s68
      %p70 = scmp.eq.s32.totalorder %s23, 0
      %p71 = por %p69, %p70
      %s73 = sadd.s32 %s72, 1
      %p76 = scmp.eq.s32.totalorder %s17, 1
      %p77 = scmp.ne.s32.totalorder %s72, %s74
      %p78 = scmp.eq.s32.totalorder %s17, 0
      %p79 = por %p77, %p78
      %p80 = scmp.ne.s32.totalorder %s72, %s74
      %p81 = scmp.eq.s32.totalorder %s22, 1
      %p82 = por %p80, %p81
      %p83 = scmp.ne.s32.totalorder %s74, %s75
      %p84 = scmp.eq.s32.totalorder %s22, 0
      %p85 = por %p83, %p84
      %p86 = scmp.ne.s32.totalorder %s74, %s75
      %p87 = scmp.eq.s32.totalorder %s23, 1
      %p88 = por %p86, %p87
      %p90 = scmp.ne.s32.totalorder %s75, %s89
      %p91 = scmp.eq.s32.totalorder %s23, 0
      %p92 = por %p90, %p91
      %s94 = sadd.s32 %s93, 1
      %p97 = scmp.eq.s32.totalorder %s17, 1
      %p98 = scmp.ne.s32.totalorder %s93, %s95
      %p99 = scmp.eq.s32.totalorder %s17, 0
      %p100 = por %p98, %p99
      %p101 = scmp.ne.s32.totalorder %s93, %s95
      %p102 = scmp.eq.s32.totalorder %s22, 1
      %p103 = por %p101, %p102
      %p104 = scmp.ne.s32.totalorder %s95, %s96
      %p105 = scmp.eq.s32.totalorder %s22, 0
      %p106 = por %p104, %p105
      %p107 = scmp.ne.s32.totalorder %s95, %s96
      %p108 = scmp.eq.s32.totalorder %s23, 1
      %p109 = por %p107, %p108
      %p111 = scmp.ne.s32.totalorder %s96, %s110
      %p112 = scmp.eq.s32.totalorder %s23, 0
      %p113 = por %p111, %p112
      %s115 = sadd.s32 %s114, 1
      %p118 = scmp.eq.s32.totalorder %s17, 1
      %p119 = scmp.ne.s32.totalorder %s114, %s116
      %p120 = scmp.eq.s32.totalorder %s17, 0
      %p121 = por %p119, %p120
      %p122 = scmp.ne.s32.totalorder %s114, %s116
      %p123 = scmp.eq.s32.totalorder %s22, 1
      %p124 = por %p122, %p123
      %p125 = scmp.ne.s32.totalorder %s116, %s117
      %p126 = scmp.eq.s32.totalorder %s22, 0
      %p127 = por %p125, %p126
      %p128 = scmp.ne.s32.totalorder %s116, %s117
      %p129 = scmp.eq.s32.totalorder %s23, 1
      %p130 = por %p128, %p129
      %p132 = scmp.ne.s32.totalorder %s117, %s131
      %p133 = scmp.eq.s32.totalorder %s23, 0
      %p134 = por %p132, %p133
      %s136 = sadd.s32 %s135, 1
      %p139 = scmp.eq.s32.totalorder %s17, 1
      %p140 = scmp.ne.s32.totalorder %s135, %s137
      %p141 = scmp.eq.s32.totalorder %s17, 0
      %p142 = por %p140, %p141
      %p143 = scmp.ne.s32.totalorder %s135, %s137
      %p144 = scmp.eq.s32.totalorder %s22, 1
      %p145 = por %p143, %p144
      %p146 = scmp.ne.s32.totalorder %s137, %s138
      %p147 = scmp.eq.s32.totalorder %s22, 0
      %p148 = por %p146, %p147
      %p149 = scmp.ne.s32.totalorder %s137, %s138
      %p150 = scmp.eq.s32.totalorder %s23, 1
      %p151 = por %p149, %p150
      %p153 = scmp.ne.s32.totalorder %s138, %s152
      %p154 = scmp.eq.s32.totalorder %s23, 0
      %p155 = por %p153, %p154
      %s157 = sadd.s32 %s156, 1
      %p160 = scmp.eq.s32.totalorder %s17, 1
      %p161 = scmp.ne.s32.totalorder %s156, %s158
      %p162 = scmp.eq.s32.totalorder %s17, 0
      %p163 = por %p161, %p162
      %p164 = scmp.ne.s32.totalorder %s156, %s158
      %p165 = scmp.eq.s32.totalorder %s22, 1
      %p166 = por %p164, %p165
      %p167 = scmp.ne.s32.totalorder %s158, %s159
      %p168 = scmp.eq.s32.totalorder %s22, 0
      %p169 = por %p167, %p168
      %p170 = scmp.ne.s32.totalorder %s158, %s159
      %p171 = scmp.eq.s32.totalorder %s23, 1
      %p172 = por %p170, %p171
      %p174 = scmp.ne.s32.totalorder %s159, %s173
      %p175 = scmp.eq.s32.totalorder %s23, 0
      %p176 = por %p174, %p175
      %s177 = ssub.s32 %s17, %s24
      %p178 = scmp.eq.s32.totalorder %s177, 0
      %s180 = sadd.s32 %s179, 1
      %s181 = scalar_select %p178, %s179, %s180
      %p184 = pneg %p178
      %p185 = scmp.eq.s32.totalorder %s17, 1
      %p186 = por %p184, %p185
      %p187 = scmp.ne.s32.totalorder %s179, %s182
      %p188 = scmp.eq.s32.totalorder %s17, 0
      %p189 = por %p187, %p188
      %p190 = scmp.ne.s32.totalorder %s179, %s182
      %p191 = scmp.eq.s32.totalorder %s22, 1
      %p192 = por %p190, %p191
      %p193 = scmp.ne.s32.totalorder %s182, %s183
      %p194 = scmp.eq.s32.totalorder %s22, 0
      %p195 = por %p193, %p194
      %p196 = scmp.ne.s32.totalorder %s182, %s183
      %p197 = scmp.eq.s32.totalorder %s23, 1
      %p198 = por %p196, %p197
      %p200 = scmp.ne.s32.totalorder %s183, %s199
      %p201 = scmp.eq.s32.totalorder %s23, 0
      %p202 = por %p200, %p201
      %p203 = scmp.le.s32.totalorder 1, %s17
      %p204 = scmp.lt.s32.totalorder %s17, 3
      %p205 = pnand %p203, %p204
      %p206 = pneg %p205
      // Predicated region
      $region9: #{tpu_custom_call.1} parent=5 // pred_check
        _
      $region10: #{tpu_custom_call.1} parent=5 // pred_check_branch
        %208 = sbr.rel (%p205) target = $region12
      $region11: #{tpu_custom_call.1} parent=5 // pred_region
        %s209 = ssub.s32 %s17, 1
        // Predicated region
        $region13: #{tpu_custom_call.1} parent=11 // pred_check
          %p210 = pneg %p64
        $region14: #{tpu_custom_call.1} parent=11 // pred_check_branch
          %212 = sbr.rel (%p210) target = $region16
        $region15: #{tpu_custom_call.1} parent=11 // pred_region
          _
        $region16: #{tpu_custom_call.1} parent=11 // pred_fallthru
          _
        // Predicated region
        $region17: #{tpu_custom_call.1} parent=11 // pred_check
          %p213 = pneg %p85
        $region18: #{tpu_custom_call.1} parent=11 // pred_check_branch
          %215 = sbr.rel (%p213) target = $region20
        $region19: #{tpu_custom_call.1} parent=11 // pred_region
          _
        $region20: #{tpu_custom_call.1} parent=11 // pred_fallthru
          _
        // Predicated region
        $region21: #{tpu_custom_call.1} parent=11 // pred_check
          %p216 = pneg %p106
        $region22: #{tpu_custom_call.1} parent=11 // pred_check_branch
          %218 = sbr.rel (%p216) target = $region24
        $region23: #{tpu_custom_call.1} parent=11 // pred_region
          _
        $region24: #{tpu_custom_call.1} parent=11 // pred_fallthru
          _
        // Predicated region
        $region25: #{tpu_custom_call.1} parent=11 // pred_check
          %p219 = pneg %p127
        $region26: #{tpu_custom_call.1} parent=11 // pred_check_branch
          %221 = sbr.rel (%p219) target = $region28
        $region27: #{tpu_custom_call.1} parent=11 // pred_region
          _
        $region28: #{tpu_custom_call.1} parent=11 // pred_fallthru
          _
        // Predicated region
        $region29: #{tpu_custom_call.1} parent=11 // pred_check
          %p222 = pneg %p148
        $region30: #{tpu_custom_call.1} parent=11 // pred_check_branch
          %224 = sbr.rel (%p222) target = $region32
        $region31: #{tpu_custom_call.1} parent=11 // pred_region
          %226 = vsyncadd [#allocation3], 0
          %s227 = sshll.u32 %s5, 4
          %s228 = int_to_ptr.hbm [resolvable:$true] %s227
          %s229 = sshll.u32 [#allocation2], 4
          %s230 = int_to_ptr.vmem [resolvable:$true] %s229
          %235 = dma.hbm_to_vmem [thread:$0]  %s228, 1024, %s230, [#allocation3], 64, 64, 4
        $region32: #{tpu_custom_call.1} parent=11 // pred_fallthru
          _
        // Predicated region
        $region33: #{tpu_custom_call.1} parent=11 // pred_check
          %p236 = pneg %p169
        $region34: #{tpu_custom_call.1} parent=11 // pred_check_branch
          %238 = sbr.rel (%p236) target = $region36
        $region35: #{tpu_custom_call.1} parent=11 // pred_region
          _
        $region36: #{tpu_custom_call.1} parent=11 // pred_fallthru
          _
      $region12: #{tpu_custom_call.1} parent=5 // pred_fallthru
        _
      %p239 = scmp.lt.s32.totalorder %s17, 2
      // Predicated region
      $region37: #{tpu_custom_call.1} parent=5 // pred_check
        %p240 = pneg %p239
      $region38: #{tpu_custom_call.1} parent=5 // pred_check_branch
        %242 = sbr.rel (%p240) target = $region40
      $region39: #{tpu_custom_call.1} parent=5 // pred_region
        // Predicated region
        $region41: #{tpu_custom_call.1} parent=39 // pred_check
          %p243 = pneg %p37
        $region42: #{tpu_custom_call.1} parent=39 // pred_check_branch
          %245 = sbr.rel (%p243) target = $region44
        $region43: #{tpu_custom_call.1} parent=39 // pred_region
          %s246 = smul.u32 4, %s17
          %s247 = ssub.s32 7, %s246
          %p248 = scmp.lt.s32.totalorder %s247, 4
          %s249 = scalar_select %p248, %s247, 4
          %s250 = smul.u32 8, %s249
          %p251 = scmp.lt.s32.totalorder %s246, 6
          %s252 = scalar_select %p251, %s246, 6
          %s253 = smul.addr %s252, 8
          %s254 = scalar_lea.vmem %s0, %s253
          %s255 = smul.u32 4, %s17
          %s256 = ssub.s32 7, %s255
          %p257 = scmp.lt.s32.totalorder %s256, 4
          %s258 = scalar_select %p257, %s256, 4
          %s259 = smul.u32 8, %s258
        $region44: #{tpu_custom_call.1} parent=39 // pred_fallthru
          _
      $region40: #{tpu_custom_call.1} parent=5 // pred_fallthru
        _
      %p260 = scmp.le.s32.totalorder 1, %s17
      %p261 = scmp.lt.s32.totalorder %s17, 3
      %p262 = pnand %p260, %p261
      %p263 = pneg %p262
      // Predicated region
      $region45: #{tpu_custom_call.1} parent=5 // pred_check
        _
      $region46: #{tpu_custom_call.1} parent=5 // pred_check_branch
        %265 = sbr.rel (%p262) target = $region48
      $region47: #{tpu_custom_call.1} parent=5 // pred_region
        %s266 = ssub.s32 %s17, 1
        // Predicated region
        $region49: #{tpu_custom_call.1} parent=47 // pred_check
          %p267 = pneg %p148
        $region50: #{tpu_custom_call.1} parent=47 // pred_check_branch
          %269 = sbr.rel (%p267) target = $region52
        $region51: #{tpu_custom_call.1} parent=47 // pred_region
          %271 = dma.done [#allocation3], 1024
        $region52: #{tpu_custom_call.1} parent=47 // pred_fallthru
          _
        %s272 = smul.u32 4, %s22
        %s273 = ssub.s32 7, %s272
        %p274 = scmp.lt.s32.totalorder %s273, 4
        %s275 = scalar_select %p274, %s273, 4
        %s276 = smul.u32 8, %s275
        %p277 = scmp.lt.s32.totalorder %s272, 6
        %s278 = scalar_select %p277, %s272, 6
        %s279 = smul.addr %s278, 8
        %s280 = scalar_lea.vmem %s0, %s279
        %p281 = pneg %p43
        %p282 = pneg %p40
        %p283 = pneg %p64
        %p284 = pneg %p61
        %p285 = pneg %p85
        %p286 = pneg %p82
        %p287 = pneg %p106
        %p288 = pneg %p103
        %p289 = pneg %p127
        %p290 = pneg %p124
        %p291 = pneg %p148
        %p292 = pneg %p145
        %p293 = pneg %p169
        %p294 = pneg %p166
        %p295 = pneg %p195
        %p296 = pneg %p192
        %s297 = sand.u32 %s182, 1
        %s298 = scalar_lea.sflag [#allocation4], %s297
        %s299 = sand.u32 %s182, 1
        %s300 = smul.addr %s299, 32
        %s301 = scalar_lea.vmem [#allocation5], %s300
        %s302 = smul.u32 4, %s22
        %s303 = ssub.s32 7, %s302
        %p304 = scmp.lt.s32.totalorder %s303, 4
        %s305 = scalar_select %p304, %s303, 4
        %s306 = smul.u32 8, %s305
        %p307 = scmp.lt.s32.totalorder %s302, 6
        %s308 = scalar_select %p307, %s302, 6
        %s309 = smul.addr %s308, 8
        %s310 = scalar_lea.vmem %s0, %s309
        %s311 = smul.u32 4, %s22
        %s312 = ssub.s32 7, %s311
        %p313 = scmp.lt.s32.totalorder %s312, 4
        %s314 = scalar_select %p313, %s312, 4
        %s315 = smul.u32 8, %s314
        %s316 = smul.u32 4, %s22
        %s317 = ssub.s32 7, %s316
        %p318 = scmp.lt.s32.totalorder %s317, 4
        %s319 = scalar_select %p318, %s317, 4
        %s320 = smul.u32 8, %s319
        %v322 = vld [vmem:[%s310] sm:$0xff]
        %v323 = vld [vmem:[%s310 + $0x8] sm:$0xff]
        %v324 = vld [vmem:[%s310 + $0x10] sm:$0xff]
        %v325 = vld [vmem:[%s310 + $0x18] sm:$0xff]
        %v326 = vpack.c.bf16 %v323, %v322
        %v327 = vpack.c.bf16 %v325, %v324
        %v328 = vld [vmem:[%s1] sm:$0xf]
        %v329 = vld [vmem:[%s1 + $0x4] sm:$0xf]
        %v330 = vld [vmem:[%s1 + $0x8] sm:$0xf]
        %v331 = vld [vmem:[%s1 + $0xc] sm:$0xf]
        %v332 = vld [vmem:[%s2] sm:$0x1]
        %v334 = vperm.slane %v332, 0
        %v340 = vunpack.c.l.b16 %v328
        %v341 = vunpack.c.l.b16 %v329
        %v342 = vunpack.c.l.b16 %v330
        %v343 = vunpack.c.l.b16 %v331
        %v344 = vpack.c.b16 %v341, %v340
        %v345 = vpack.c.b16 %v343, %v342
        %vm348 = vcmask 261120
        %v350 = vsel %vm348, %v326, 0
        %v353 = vsel %vm348, %v327, 0
        %355 = vmatpush.bf16.msra.mxu0 0
        %356 = vmatpush.bf16.msra.mxu0 0
        %357 = vmatpush.bf16.msra.mxu0 0
        %358 = vmatpush.bf16.msra.mxu0 0
        %359 = vmatpush.bf16.msra.mxu0 0
        %360 = vmatpush.bf16.msra.mxu0 0
        %361 = vmatpush.bf16.msra.mxu0 %v345
        %362 = vmatpush.bf16.msra.mxu0 %v344
        %363 = vmatmul.bf16.gmra.mxu0 %v350
        %v364 = vpop.f32.mrf.mxu0
        %v365 = vadd.f32 %v334, %v364
        %v366 = vpop.f32.mrf.mxu0
        %v367 = vadd.f32 %v334, %v366
        %368 = vmatmul.bf16.gmra.mxu0 %v353
        %v369 = vpop.f32.mrf.mxu0
        %v370 = vadd.f32 %v334, %v369
        %v371 = vpop.f32.mrf.mxu0
        %v372 = vadd.f32 %v334, %v371
        %373 = vdwg.mxu0
        %v374 = vmul.f32 %v365, 0.5
        %v375 = vmul.f32 %v367, 0.5
        %v376 = vmul.f32 %v370, 0.5
        %v377 = vmul.f32 %v372, 0.5
        %v378 = vtanh.pop %v374
        %v379 = vtanh.pop %v375
        %v380 = vtanh.pop %v376
        %v381 = vtanh.pop %v377
        %v382 = vadd.f32 %v378, 1.0
        %v383 = vadd.f32 %v379, 1.0
        %v384 = vadd.f32 %v380, 1.0
        %v385 = vadd.f32 %v381, 1.0
        %v386 = vmul.f32 %v382, 0.5
        %v387 = vmul.f32 %v383, 0.5
        %v388 = vmul.f32 %v384, 0.5
        %v389 = vmul.f32 %v385, 0.5
        %v390 = vpack.c.bf16 %v387, %v386
        %v391 = vpack.c.bf16 %v389, %v388
        %v392 = vld [vmem:[%s3] sm:$0xf]
        %v393 = vld [vmem:[%s3 + $0x4] sm:$0xf]
        %v394 = vld [vmem:[%s3 + $0x8] sm:$0xf]
        %v395 = vld [vmem:[%s3 + $0xc] sm:$0xf]
        %v396 = vld [vmem:[%s3 + $0x10] sm:$0xf]
        %v397 = vld [vmem:[%s3 + $0x14] sm:$0xf]
        %v398 = vld [vmem:[%s3 + $0x18] sm:$0xf]
        %v399 = vld [vmem:[%s3 + $0x1c] sm:$0xf]
        %v400 = vld [vmem:[%s3 + $0x20] sm:$0xf]
        %v401 = vld [vmem:[%s3 + $0x24] sm:$0xf]
        %v402 = vld [vmem:[%s3 + $0x28] sm:$0xf]
        %v403 = vld [vmem:[%s3 + $0x2c] sm:$0xf]
        %v404 = vld [vmem:[%s3 + $0x30] sm:$0xf]
        %v405 = vld [vmem:[%s3 + $0x34] sm:$0xf]
        %v406 = vld [vmem:[%s3 + $0x38] sm:$0xf]
        %v407 = vld [vmem:[%s3 + $0x3c] sm:$0xf]
        %v408 = vld [vmem:[%s4] sm:$0x1]
        %v410 = vperm.slane %v408, 0
        %v428 = vunpack.c.l.b16 %v392
        %v429 = vunpack.c.l.b16 %v393
        %v430 = vunpack.c.l.b16 %v394
        %v431 = vunpack.c.l.b16 %v395
        %v432 = vunpack.c.l.b16 %v396
        %v433 = vunpack.c.l.b16 %v397
        %v434 = vunpack.c.l.b16 %v398
        %v435 = vunpack.c.l.b16 %v399
        %v436 = vunpack.c.l.b16 %v400
        %v437 = vunpack.c.l.b16 %v401
        %v438 = vunpack.c.l.b16 %v402
        %v439 = vunpack.c.l.b16 %v403
        %v440 = vunpack.c.l.b16 %v404
        %v441 = vunpack.c.l.b16 %v405
        %v442 = vunpack.c.l.b16 %v406
        %v443 = vunpack.c.l.b16 %v407
        %v444 = vpack.c.b16 %v429, %v428
        %v445 = vpack.c.b16 %v431, %v430
        %v446 = vpack.c.b16 %v433, %v432
        %v447 = vpack.c.b16 %v435, %v434
        %v448 = vpack.c.b16 %v437, %v436
        %v449 = vpack.c.b16 %v439, %v438
        %v450 = vpack.c.b16 %v441, %v440
        %v451 = vpack.c.b16 %v443, %v442
        %460 = vmatpush.bf16.msra.mxu0 %v451
        %461 = vmatpush.bf16.msra.mxu0 %v450
        %462 = vmatpush.bf16.msra.mxu0 %v449
        %463 = vmatpush.bf16.msra.mxu0 %v448
        %464 = vmatpush.bf16.msra.mxu0 %v447
        %465 = vmatpush.bf16.msra.mxu0 %v446
        %466 = vmatpush.bf16.msra.mxu0 %v445
        %467 = vmatpush.bf16.msra.mxu0 %v444
        %468 = vmatmul.bf16.gmra.mxu0 %v390
        %v469 = vpop.f32.mrf.mxu0
        %v470 = vadd.f32 %v410, %v469
        %v471 = vpop.f32.mrf.mxu0
        %v472 = vadd.f32 %v410, %v471
        %473 = vmatmul.bf16.gmra.mxu0 %v391
        %v474 = vpop.f32.mrf.mxu0
        %v475 = vadd.f32 %v410, %v474
        %v476 = vpop.f32.mrf.mxu0
        %v477 = vadd.f32 %v410, %v476
        %478 = vdwg.mxu0
        %v479 = vmul.f32 %v470, 0.5
        %v480 = vmul.f32 %v472, 0.5
        %v481 = vmul.f32 %v475, 0.5
        %v482 = vmul.f32 %v477, 0.5
        %v483 = vtanh.pop %v479
        %v484 = vtanh.pop %v480
        %v485 = vtanh.pop %v481
        %v486 = vtanh.pop %v482
        %v487 = vadd.f32 %v483, 1.0
        %v488 = vadd.f32 %v484, 1.0
        %v489 = vadd.f32 %v485, 1.0
        %v490 = vadd.f32 %v486, 1.0
        %v491 = vmul.f32 %v487, 0.5
        %v492 = vmul.f32 %v488, 0.5
        %v493 = vmul.f32 %v489, 0.5
        %v494 = vmul.f32 %v490, 0.5
        %v495 = vpack.c.bf16 %v492, %v491
        %v496 = vpack.c.bf16 %v494, %v493
        %v497 = vld [vmem:[#allocation2] sm:$0xf]
        %v498 = vld [vmem:[#allocation2 + $0x4] sm:$0xf]
        %v499 = vld [vmem:[#allocation2 + $0x8] sm:$0xf]
        %v500 = vld [vmem:[#allocation2 + $0xc] sm:$0xf]
        %v501 = vld [vmem:[#allocation2 + $0x10] sm:$0xf]
        %v502 = vld [vmem:[#allocation2 + $0x14] sm:$0xf]
        %v503 = vld [vmem:[#allocation2 + $0x18] sm:$0xf]
        %v504 = vld [vmem:[#allocation2 + $0x1c] sm:$0xf]
        %v505 = vld [vmem:[#allocation2 + $0x20] sm:$0xf]
        %v506 = vld [vmem:[#allocation2 + $0x24] sm:$0xf]
        %v507 = vld [vmem:[#allocation2 + $0x28] sm:$0xf]
        %v508 = vld [vmem:[#allocation2 + $0x2c] sm:$0xf]
        %v509 = vld [vmem:[#allocation2 + $0x30] sm:$0xf]
        %v510 = vld [vmem:[#allocation2 + $0x34] sm:$0xf]
        %v511 = vld [vmem:[#allocation2 + $0x38] sm:$0xf]
        %v512 = vld [vmem:[#allocation2 + $0x3c] sm:$0xf]
        %v513 = vld [vmem:[%s6] sm:$0x1]
        %v515 = vperm.slane %v513, 0
        %v533 = vunpack.c.l.b16 %v497
        %v534 = vunpack.c.l.b16 %v498
        %v535 = vunpack.c.l.b16 %v499
        %v536 = vunpack.c.l.b16 %v500
        %v537 = vunpack.c.l.b16 %v501
        %v538 = vunpack.c.l.b16 %v502
        %v539 = vunpack.c.l.b16 %v503
        %v540 = vunpack.c.l.b16 %v504
        %v541 = vunpack.c.l.b16 %v505
        %v542 = vunpack.c.l.b16 %v506
        %v543 = vunpack.c.l.b16 %v507
        %v544 = vunpack.c.l.b16 %v508
        %v545 = vunpack.c.l.b16 %v509
        %v546 = vunpack.c.l.b16 %v510
        %v547 = vunpack.c.l.b16 %v511
        %v548 = vunpack.c.l.b16 %v512
        %v549 = vpack.c.b16 %v534, %v533
        %v550 = vpack.c.b16 %v536, %v535
        %v551 = vpack.c.b16 %v538, %v537
        %v552 = vpack.c.b16 %v540, %v539
        %v553 = vpack.c.b16 %v542, %v541
        %v554 = vpack.c.b16 %v544, %v543
        %v555 = vpack.c.b16 %v546, %v545
        %v556 = vpack.c.b16 %v548, %v547
        %565 = vmatpush.bf16.msra.mxu0 %v556
        %566 = vmatpush.bf16.msra.mxu0 %v555
        %567 = vmatpush.bf16.msra.mxu0 %v554
        %568 = vmatpush.bf16.msra.mxu0 %v553
        %569 = vmatpush.bf16.msra.mxu0 %v552
        %570 = vmatpush.bf16.msra.mxu0 %v551
        %571 = vmatpush.bf16.msra.mxu0 %v550
        %572 = vmatpush.bf16.msra.mxu0 %v549
        %573 = vmatmul.bf16.gmra.mxu0 %v495
        %v574 = vpop.f32.mrf.mxu0
        %v575 = vadd.f32 %v515, %v574
        %v576 = vpop.f32.mrf.mxu0
        %v577 = vadd.f32 %v515, %v576
        %578 = vmatmul.bf16.gmra.mxu0 %v496
        %v579 = vpop.f32.mrf.mxu0
        %v580 = vadd.f32 %v515, %v579
        %v581 = vpop.f32.mrf.mxu0
        %v582 = vadd.f32 %v515, %v581
        %583 = vdwg.mxu0
        %584 = vst [vmem:[%s301] sm:$0xff] %v575
        %585 = vst [vmem:[%s301 + $0x8] sm:$0xff] %v577
        %586 = vst [vmem:[%s301 + $0x10] sm:$0xff] %v580
        %587 = vst [vmem:[%s301 + $0x18] sm:$0xff] %v582
        %s588 = sand.u32 %s182, 1
        %s589 = scalar_lea.sflag [#allocation4], %s588
        %s590 = sand.u32 %s182, 1
        %s591 = smul.addr %s590, 32
        %s592 = scalar_lea.vmem [#allocation5], %s591
        // Predicated region
        $region53: #{tpu_custom_call.1} parent=47 // pred_check
          %p593 = pneg %p192
        $region54: #{tpu_custom_call.1} parent=47 // pred_check_branch
          %595 = sbr.rel (%p593) target = $region56
        $region55: #{tpu_custom_call.1} parent=47 // pred_region
          %s596 = smul.u32 4, %s22
          %s597 = ssub.s32 7, %s596
          %p598 = scmp.lt.s32.totalorder %s597, 4
          %s599 = scalar_select %p598, %s597, 4
          %s600 = smul.u32 8, %s599
          %s601 = ssub.s32 32, %s600
          %s602 = sshll.u32 %s601, 4
          %603 = vsyncadd %s589, %s602
          %p604 = scmp.ne.s32.totalorder 0, %s600
          %s605 = smul.addr %s596, 8
          %s606 = scalar_lea.hbm %s7, %s605
          %s607 = smul.u32 8, %s599
          %s608 = sshll.u32 %s592, 4
          %s609 = int_to_ptr.vmem [resolvable:$true] %s608
          %s610 = sshll.u32 %s606, 4
          %s611 = int_to_ptr.hbm [resolvable:$true] %s610
          %s612 = sshll.u32 %s607, 4
          %616 = dma.vmem_to_hbm [thread:$0]  (%p604), %s609, %s612, %s611, %s589, 128, 128, 8
        $region56: #{tpu_custom_call.1} parent=47 // pred_fallthru
          _
      $region48: #{tpu_custom_call.1} parent=5 // pred_fallthru
        _
      %p617 = scmp.le.s32.totalorder 2, %s17
      // Predicated region
      $region57: #{tpu_custom_call.1} parent=5 // pred_check
        %p618 = pneg %p617
      $region58: #{tpu_custom_call.1} parent=5 // pred_check_branch
        %620 = sbr.rel (%p618) target = $region60
      $region59: #{tpu_custom_call.1} parent=5 // pred_region
        %s621 = ssub.s32 %s17, 2
        // Predicated region
        $region61: #{tpu_custom_call.1} parent=59 // pred_check
          %p622 = pneg %p198
        $region62: #{tpu_custom_call.1} parent=59 // pred_check_branch
          %624 = sbr.rel (%p622) target = $region64
        $region63: #{tpu_custom_call.1} parent=59 // pred_region
          %s625 = sand.u32 %s183, 1
          %s626 = scalar_lea.sflag [#allocation4], %s625
          %s627 = sand.u32 %s183, 1
          %s628 = smul.addr %s627, 32
          %s629 = scalar_lea.vmem [#allocation5], %s628
          %631 = dma.done %s626, 512
        $region64: #{tpu_custom_call.1} parent=59 // pred_fallthru
          _
      $region60: #{tpu_custom_call.1} parent=5 // pred_fallthru
        _
    $region6: #{tpu_custom_call.1} parent=1 // loop_footer
      %s21 = sadd.s32 1, %s17
    $region7: #{tpu_custom_call.1} parent=1 // loop_footer_branch
      %16 = sbr.rel target = $region3
    $region8: #{tpu_custom_call.1} parent=1 // loop_exit
      _
    %632 = vsyncpa [#allocation3], 1
    %s633 = scalar_lea.sflag [#allocation3], 1
    %634 = vsyncpa %s633, 1
    %635 = vsyncpa [#allocation4], 1
    %s636 = scalar_lea.sflag [#allocation4], 1
    %637 = vsyncpa %s636, 1

</llo_original>
